<compile_context>
chip_gen: v5e
topology: v5e:2x2
jax: 0.10.0
libtpu: 0.0.40
codegen_flags: <defaults>
</compile_context>

<pallas_src>
import functools

import jax
import jax.numpy as jnp
from jax.experimental import pallas as pl
from jax.experimental.pallas import tpu as pltpu

LANE = 128
SMALL_GRAPH_NODES = 512  # fused single-kernel path threshold (padded node count)


def _round_up(x, m):
    return ((x + m - 1) // m) * m


def _pad2d(a, rows, cols):
    return jnp.pad(a, ((0, rows - a.shape[0]), (0, cols - a.shape[1])))


def _pick_tile(np_):
    """Largest 128-multiple divisor of np_ that is <= 512 (np_ is a multiple of 128)."""
    for t in (512, 384, 256, 128):
        if np_ % t == 0:
            return t
    return 128


# ---------------------------------------------------------------------------
# Kernel 1: first-layer feature transform  XW = X @ W   (row-tiled, bf16)
# ---------------------------------------------------------------------------
def _xw_kernel(x_ref, w_ref, o_ref):
    o_ref[...] = jnp.dot(
        x_ref[...], w_ref[...], preferred_element_type=jnp.float32
    ).astype(o_ref.dtype)


def feature_transform(x_bf16, w_bf16, *, tile_m):
    np_, fp = x_bf16.shape
    hp = w_bf16.shape[1]
    return pl.pallas_call(
        _xw_kernel,
        out_shape=jax.ShapeDtypeStruct((np_, hp), jnp.bfloat16),
        grid_spec=pltpu.PrefetchScalarGridSpec(
            num_scalar_prefetch=0,
            grid=(np_ // tile_m,),
            in_specs=[
                pl.BlockSpec((tile_m, fp), lambda i: (i, 0)),
                pl.BlockSpec((fp, hp), lambda i: (0, 0)),
            ],
            out_specs=pl.BlockSpec((tile_m, hp), lambda i: (i, 0)),
        ),
        compiler_params=pltpu.CompilerParams(dimension_semantics=("parallel",)),
    )(x_bf16, w_bf16)


# ---------------------------------------------------------------------------
# Kernel 2: neighborhood aggregation (+ optional fused next-layer X@W)
#   acc = A_norm @ XW  over k tiles (XW kept VMEM-resident, sliced in-kernel)
#   finalize: h = relu(acc + b);  out = h @ W_next  (if fused)  else  h
# grid = (row tiles [parallel], k tiles [arbitrary, last]); f32 VMEM accumulator.
# ---------------------------------------------------------------------------
def _aggregate_kernel(a_ref, xw_ref, b_ref, *rest, tile_k, fuse_next):
    if fuse_next:
        wn_ref, o_ref, acc_ref = rest
    else:
        o_ref, acc_ref = rest

    k = pl.program_id(1)

    @pl.when(k == 0)
    def _():
        acc_ref[...] = jnp.zeros_like(acc_ref)

    start = pl.multiple_of(k * tile_k, LANE)
    acc_ref[...] += jnp.dot(
        a_ref[...], xw_ref[pl.ds(start, tile_k), :],
        preferred_element_type=jnp.float32,
    )

    @pl.when(k == pl.num_programs(1) - 1)
    def _():
        h = jnp.maximum(acc_ref[...] + b_ref[...], 0.0)
        if fuse_next:
            o_ref[...] = jnp.dot(
                h.astype(jnp.bfloat16), wn_ref[...],
                preferred_element_type=jnp.float32,
            ).astype(o_ref.dtype)
        else:
            o_ref[...] = h.astype(o_ref.dtype)


def aggregate(a_bf16, xw_bf16, bias_f32, w_next_bf16=None, *, tile_m, tile_k):
    np_ = a_bf16.shape[0]
    hp = xw_bf16.shape[1]
    fuse = w_next_bf16 is not None
    hp_out = w_next_bf16.shape[1] if fuse else hp
    grid = (np_ // tile_m, np_ // tile_k)

    in_specs = [
        pl.BlockSpec((tile_m, tile_k), lambda i, k: (i, k)),   # A: streamed tiles
        pl.BlockSpec((np_, hp), lambda i, k: (0, 0)),          # XW: resident in VMEM
        pl.BlockSpec((1, hp), lambda i, k: (0, 0)),            # bias: resident
    ]
    args = [a_bf16, xw_bf16, bias_f32]
    if fuse:
        in_specs.append(pl.BlockSpec((hp, hp_out), lambda i, k: (0, 0)))  # W_next resident
        args.append(w_next_bf16)

    cost = pl.CostEstimate(
        flops=2 * np_ * np_ * hp + (2 * np_ * hp * hp_out if fuse else 0),
        transcendentals=0,
        bytes_accessed=(np_ * np_ * 2            # A (bf16)
                        + np_ * hp * 2           # XW read once (resident)
                        + np_ * hp_out * 2       # output
                        + hp * 4                 # bias
                        + (hp * hp_out * 2 if fuse else 0)),
    )

    return pl.pallas_call(
        functools.partial(_aggregate_kernel, tile_k=tile_k, fuse_next=fuse),
        out_shape=jax.ShapeDtypeStruct((np_, hp_out), jnp.bfloat16),
        grid_spec=pltpu.PrefetchScalarGridSpec(
            num_scalar_prefetch=0,
            grid=grid,
            in_specs=in_specs,
            out_specs=pl.BlockSpec((tile_m, hp_out), lambda i, k: (i, 0)),
            scratch_shapes=[pltpu.VMEM((tile_m, hp), jnp.float32)],
        ),
        compiler_params=pltpu.CompilerParams(
            dimension_semantics=("parallel", "arbitrary"),
            vmem_limit_bytes=64 * 1024 * 1024,
        ),
        cost_estimate=cost,
    )(*args)


# ---------------------------------------------------------------------------
# Kernel 3: fused global mean pool + classifier  out = (P @ H) @ Wf + bf
# P kept in f32; accumulates pooled sums over k tiles, Linear applied at last step.
# ---------------------------------------------------------------------------
def _pool_ffn_kernel(p_ref, h_ref, wf_ref, bf_ref, o_ref, acc_ref):
    k = pl.program_id(0)

    @pl.when(k == 0)
    def _():
        acc_ref[...] = jnp.zeros_like(acc_ref)

    acc_ref[...] += jnp.dot(
        p_ref[...], h_ref[...].astype(jnp.float32), preferred_element_type=jnp.float32
    )

    @pl.when(k == pl.num_programs(0) - 1)
    def _():
        o_ref[...] = (
            jnp.dot(acc_ref[...], wf_ref[...], preferred_element_type=jnp.float32)
            + bf_ref[...]
        ).astype(o_ref.dtype)


def pool_and_ffn(p_f32, h_bf16, wf_f32, bf_f32, *, tile_k):
    gp, np_ = p_f32.shape
    hp, cp = wf_f32.shape
    return pl.pallas_call(
        _pool_ffn_kernel,
        out_shape=jax.ShapeDtypeStruct((gp, cp), jnp.float32),
        grid_spec=pltpu.PrefetchScalarGridSpec(
            num_scalar_prefetch=0,
            grid=(np_ // tile_k,),
            in_specs=[
                pl.BlockSpec((gp, tile_k), lambda k: (0, k)),
                pl.BlockSpec((tile_k, hp), lambda k: (k, 0)),
                pl.BlockSpec((hp, cp), lambda k: (0, 0)),
                pl.BlockSpec((1, cp), lambda k: (0, 0)),
            ],
            out_specs=pl.BlockSpec((gp, cp), lambda k: (0, 0)),
            scratch_shapes=[pltpu.VMEM((gp, hp), jnp.float32)],
        ),
        compiler_params=pltpu.CompilerParams(dimension_semantics=("arbitrary",)),
    )(p_f32, h_bf16, wf_f32, bf_f32)


# ---------------------------------------------------------------------------
# Kernel 4: fused whole-forward kernel for tiny graphs (np_ <= 512, no grid).
# Everything stays in VMEM: per layer XW, A@XW+b, ReLU; then pool + Linear.
# ---------------------------------------------------------------------------
def _fused_small_kernel(x_ref, a_ref, p_ref, *rest, num_layers):
    conv_refs = rest[: 2 * num_layers]
    wf_ref = rest[2 * num_layers]
    bf_ref = rest[2 * num_layers + 1]
    o_ref = rest[2 * num_layers + 2]

    a = a_ref[...]
    h = x_ref[...]
    for l in range(num_layers):
        w = conv_refs[2 * l][...]
        b = conv_refs[2 * l + 1][...]
        xw = jnp.dot(h, w, preferred_element_type=jnp.float32).astype(jnp.bfloat16)
        h = jnp.maximum(
            jnp.dot(a, xw, preferred_element_type=jnp.float32) + b, 0.0
        ).astype(jnp.bfloat16)

    pooled = jnp.dot(
        p_ref[...], h.astype(jnp.float32), preferred_element_type=jnp.float32
    )
    o_ref[...] = (
        jnp.dot(pooled, wf_ref[...], preferred_element_type=jnp.float32) + bf_ref[...]
    ).astype(o_ref.dtype)


def fused_small_forward(x_bf16, a_bf16, p_f32, conv_w_pad, conv_b_pad, wf_f32, bf_f32):
    num_layers = len(conv_w_pad)
    gp = p_f32.shape[0]
    cp = wf_f32.shape[1]
    args = [x_bf16, a_bf16, p_f32]
    for w, b in zip(conv_w_pad, conv_b_pad):
        args += [w, b]
    args += [wf_f32, bf_f32]
    return pl.pallas_call(
        functools.partial(_fused_small_kernel, num_layers=num_layers),
        out_shape=jax.ShapeDtypeStruct((gp, cp), jnp.float32),
    )(*args)


# ---------------------------------------------------------------------------
# Glue (plain JAX): normalized adjacency, pooling matrix, reference, parameters
# ---------------------------------------------------------------------------
def build_norm_adj(edge_index, num_nodes):
    """Symmetric-normalized adjacency with self loops: D^-1/2 (A+I) D^-1/2."""
    src, dst = edge_index[0], edge_index[1]
    a = jnp.zeros((num_nodes, num_nodes), jnp.float32)
    a = a.at[dst, src].add(1.0)  # scatter-add: duplicate edges count (PyG semantics)
    a_hat = a + jnp.eye(num_nodes, dtype=jnp.float32)
    deg = a_hat.sum(axis=1)
    dinv = jnp.where(deg > 0, 1.0 / jnp.sqrt(deg), 0.0)
    return dinv[:, None] * a_hat * dinv[None, :]


def build_pool_matrix(batch, num_graphs):
    """P[g, n] = 1/|V_g| if node n belongs to graph g else 0 (mean pool)."""
    one_hot = (batch[None, :] == jnp.arange(num_graphs)[:, None]).astype(jnp.float32)
    counts = jnp.maximum(one_hot.sum(axis=1, keepdims=True), 1.0)
    return one_hot / counts


def reference_forward(x, a_norm, pool, conv_w, conv_b, ffn_w, ffn_b):
    """Pure-JAX f32 reference (no padding, no bf16) for correctness checking."""
    h = x
    for w, b in zip(conv_w, conv_b):
        h = jnp.maximum(a_norm @ (h @ w) + b[None, :], 0.0)
    return (pool @ h) @ ffn_w + ffn_b[None, :]


class GCNPallas:
    """Mirrors GCN(dim_node, dim_hidden, num_classes, dropout_level)."""

    def __init__(self, dim_node, dim_hidden, num_classes, dropout_level, key):
        self.dropout_level = dropout_level  # inference: identity
        self.num_classes = num_classes
        dims = [dim_node] + list(dim_hidden)
        self.conv_w, self.conv_b = [], []
        for i in range(len(dim_hidden)):
            key, wk = jax.random.split(key)
            fan_in, fan_out = dims[i], dims[i + 1]
            limit = jnp.sqrt(6.0 / (fan_in + fan_out))  # glorot uniform (PyG default)
            self.conv_w.append(
                jax.random.uniform(wk, (fan_in, fan_out), jnp.float32, -limit, limit)
            )
            self.conv_b.append(jnp.zeros((fan_out,), jnp.float32))
        key, wk, bk = jax.random.split(key, 3)
        limit = 1.0 / jnp.sqrt(dim_hidden[-1])  # torch Linear default init
        self.ffn_w = jax.random.uniform(
            wk, (dim_hidden[-1], num_classes), jnp.float32, -limit, limit
        )
        self.ffn_b = jax.random.uniform(bk, (num_classes,), jnp.float32, -limit, limit)

        # pre-padded, lane-dense kernel-side copies; conv weights bf16, biases f32
        self._conv_w_pad, self._conv_b_pad = [], []
        for w, b in zip(self.conv_w, self.conv_b):
            fin_p = _round_up(w.shape[0], LANE)
            hout_p = _round_up(w.shape[1], LANE)
            self._conv_w_pad.append(_pad2d(w, fin_p, hout_p).astype(jnp.bfloat16))
            self._conv_b_pad.append(_pad2d(b.reshape(1, -1), 1, hout_p))
        hp = _round_up(dim_hidden[-1], LANE)
        cp = _round_up(num_classes, LANE)
        self._ffn_w_pad = _pad2d(self.ffn_w, hp, cp)
        self._ffn_b_pad = _pad2d(self.ffn_b.reshape(1, -1), 1, cp)

    def __call__(self, x, edge_index, batch, num_graphs):
        n, f = x.shape
        np_ = _round_up(n, LANE)           # pad N only to lane granularity
        gp = _round_up(num_graphs, 8)
        fp = _round_up(f, LANE)

        a_pad = _pad2d(build_norm_adj(edge_index, n), np_, np_).astype(jnp.bfloat16)
        pool_pad = _pad2d(build_pool_matrix(batch, num_graphs), gp, np_)  # stays f32
        x_pad = _pad2d(x, np_, fp).astype(jnp.bfloat16)

        if np_ <= SMALL_GRAPH_NODES:
            # Tiny graphs: one fused kernel -> no intermediate HBM traffic / launches.
            logits_pad = fused_small_forward(
                x_pad, a_pad, pool_pad,
                self._conv_w_pad, self._conv_b_pad,
                self._ffn_w_pad, self._ffn_b_pad,
            )
            return logits_pad[:num_graphs, : self.num_classes]

        # Tiled path: tile is a 128-multiple divisor of np_ (<= 512), guaranteeing
        # >= 2 row tiles so both v7x TensorCores get work.
        tile = _pick_tile(np_)
        num_layers = len(self._conv_w_pad)

        xw = feature_transform(x_pad, self._conv_w_pad[0], tile_m=tile)  # X@W_0 once
        for l in range(num_layers):
            w_next = self._conv_w_pad[l + 1] if l + 1 < num_layers else None
            # Fused finalize computes next layer's X@W; last layer emits H_L.
            xw = aggregate(
                a_pad, xw, self._conv_b_pad[l], w_next, tile_m=tile, tile_k=tile
            )

        # dropout(p) is identity at inference
        logits_pad = pool_and_ffn(
            pool_pad, xw, self._ffn_w_pad, self._ffn_b_pad, tile_k=tile
        )
        return logits_pad[:num_graphs, : self.num_classes]


# ---------------------------------------------------------------------------
def _ring_graph_edges(num_graphs, nodes_per_graph, chord=None):
    src, dst = [], []
    for g in range(num_graphs):
        base = g * nodes_per_graph
        for i in range(nodes_per_graph):
            a, b = base + i, base + (i + 1) % nodes_per_graph
            src += [a, b]
            dst += [b, a]
            if chord:
                c = base + (i + chord) % nodes_per_graph
                src += [base + i, c]
                dst += [c, base + i]
    return jnp.array([src, dst], dtype=jnp.int32)


def _check(out, x, edge_index, batch, num_graphs, model, tag):
    n = x.shape[0]
    a_ref = build_norm_adj(edge_index, n)
    p_ref = build_pool_matrix(batch, num_graphs)
    ref = reference_forward(
        x, a_ref, p_ref, model.conv_w, model.conv_b, model.ffn_w, model.ffn_b
    )
    assert out.shape == ref.shape, (tag, out.shape, ref.shape)
    assert bool(jnp.all(jnp.isfinite(out))), tag
    err = float(jnp.max(jnp.abs(out - ref)))
    scale = float(jnp.max(jnp.abs(ref))) + 1.0
    assert err < 5e-2 * scale, f"{tag}: max abs error {err} (scale {scale})"


if __name__ == "__main__":
    key = jax.random.PRNGKey(0)

    dim_node = 8
    dim_hidden = [32, 32]
    num_classes = 4

    key, mk = jax.random.split(key)
    model = GCNPallas(dim_node, dim_hidden, num_classes, dropout_level=0.5, key=mk)

    # --- case 1: tiny batch (2 graphs x 8 nodes) -> fused single-kernel path ---
    num_graphs_s, nodes_s = 2, 8
    key, xk = jax.random.split(key)
    x_s = jax.random.normal(xk, (num_graphs_s * nodes_s, dim_node), jnp.float32)
    edge_s = _ring_graph_edges(num_graphs_s, nodes_s)
    batch_s = jnp.repeat(jnp.arange(num_graphs_s, dtype=jnp.int32), nodes_s)

    out_s = jax.block_until_ready(model(x_s, edge_s, batch_s, num_graphs_s))
    assert out_s.shape == (num_graphs_s, num_classes), out_s.shape
    _check(out_s, x_s, edge_s, batch_s, num_graphs_s, model, "fused-small")

    # --- case 2: larger batch (3 graphs x 200 nodes) -> tiled multi-kernel path ---
    num_graphs_l, nodes_l = 3, 200
    key, xk = jax.random.split(key)
    x_l = jax.random.normal(xk, (num_graphs_l * nodes_l, dim_node), jnp.float32)
    edge_l = _ring_graph_edges(num_graphs_l, nodes_l, chord=7)
    batch_l = jnp.repeat(jnp.arange(num_graphs_l, dtype=jnp.int32), nodes_l)

    out_l = jax.block_until_ready(model(x_l, edge_l, batch_l, num_graphs_l))
    assert out_l.shape == (num_graphs_l, num_classes), out_l.shape
    _check(out_l, x_l, edge_l, batch_l, num_graphs_l, model, "tiled")

    print("KERNEL_OK")
</pallas_src>

<mosaic_0001>
module attributes {stable_mosaic.version = 11 : i64} {
  func.func @_fused_small_kernel(%arg0: memref<128x128xbf16, #tpu.memory_space<vmem>>, %arg1: memref<128x128xbf16, #tpu.memory_space<vmem>>, %arg2: memref<8x128xf32, #tpu.memory_space<vmem>>, %arg3: memref<128x128xbf16, #tpu.memory_space<vmem>>, %arg4: memref<1x128xf32, #tpu.memory_space<vmem>>, %arg5: memref<128x128xbf16, #tpu.memory_space<vmem>>, %arg6: memref<1x128xf32, #tpu.memory_space<vmem>>, %arg7: memref<128x128xf32, #tpu.memory_space<vmem>>, %arg8: memref<1x128xf32, #tpu.memory_space<vmem>>, %arg9: memref<8x128xf32, #tpu.memory_space<vmem>>) attributes {dimension_semantics = [], scalar_prefetch = 0 : i64, scratch_operands = 0 : i64, tpu.core_type = #tpu.core_type<tc>} {
    %c0 = arith.constant 0 : index
    %c0_0 = arith.constant 0 : index
    %0 = vector.load %arg1[%c0, %c0_0] : memref<128x128xbf16, #tpu.memory_space<vmem>>, vector<128x128xbf16>
    %c0_1 = arith.constant 0 : index
    %c0_2 = arith.constant 0 : index
    %1 = vector.load %arg0[%c0_1, %c0_2] : memref<128x128xbf16, #tpu.memory_space<vmem>>, vector<128x128xbf16>
    %c0_3 = arith.constant 0 : index
    %c0_4 = arith.constant 0 : index
    %2 = vector.load %arg3[%c0_3, %c0_4] : memref<128x128xbf16, #tpu.memory_space<vmem>>, vector<128x128xbf16>
    %c0_5 = arith.constant 0 : index
    %c0_6 = arith.constant 0 : index
    %3 = vector.load %arg4[%c0_5, %c0_6] : memref<1x128xf32, #tpu.memory_space<vmem>>, vector<1x128xf32>
    %cst = arith.constant dense<0.000000e+00> : vector<128x128xf32>
    %4 = tpu.matmul %1, %2, %cst {dimension_numbers = #tpu.dot_dimension_numbers<[1], [0], [0], [1], [0, 0, 1, 1], [], []>} : vector<128x128xbf16>, vector<128x128xbf16>, vector<128x128xf32> -> vector<128x128xf32>
    %5 = arith.truncf %4 : vector<128x128xf32> to vector<128x128xbf16>
    %cst_7 = arith.constant dense<0.000000e+00> : vector<128x128xf32>
    %6 = tpu.matmul %0, %5, %cst_7 {dimension_numbers = #tpu.dot_dimension_numbers<[1], [0], [0], [1], [0, 0, 1, 1], [], []>} : vector<128x128xbf16>, vector<128x128xbf16>, vector<128x128xf32> -> vector<128x128xf32>
    %7 = vector.broadcast %3 : vector<1x128xf32> to vector<128x128xf32>
    %8 = arith.addf %6, %7 : vector<128x128xf32>
    %cst_8 = arith.constant 0.000000e+00 : f32
    %9 = vector.broadcast %cst_8 : f32 to vector<128x128xf32>
    %10 = arith.maximumf %8, %9 : vector<128x128xf32>
    %11 = arith.truncf %10 : vector<128x128xf32> to vector<128x128xbf16>
    %c0_9 = arith.constant 0 : index
    %c0_10 = arith.constant 0 : index
    %12 = vector.load %arg5[%c0_9, %c0_10] : memref<128x128xbf16, #tpu.memory_space<vmem>>, vector<128x128xbf16>
    %c0_11 = arith.constant 0 : index
    %c0_12 = arith.constant 0 : index
    %13 = vector.load %arg6[%c0_11, %c0_12] : memref<1x128xf32, #tpu.memory_space<vmem>>, vector<1x128xf32>
    %cst_13 = arith.constant dense<0.000000e+00> : vector<128x128xf32>
    %14 = tpu.matmul %11, %12, %cst_13 {dimension_numbers = #tpu.dot_dimension_numbers<[1], [0], [0], [1], [0, 0, 1, 1], [], []>} : vector<128x128xbf16>, vector<128x128xbf16>, vector<128x128xf32> -> vector<128x128xf32>
    %15 = arith.truncf %14 : vector<128x128xf32> to vector<128x128xbf16>
    %cst_14 = arith.constant dense<0.000000e+00> : vector<128x128xf32>
    %16 = tpu.matmul %0, %15, %cst_14 {dimension_numbers = #tpu.dot_dimension_numbers<[1], [0], [0], [1], [0, 0, 1, 1], [], []>} : vector<128x128xbf16>, vector<128x128xbf16>, vector<128x128xf32> -> vector<128x128xf32>
    %17 = vector.broadcast %13 : vector<1x128xf32> to vector<128x128xf32>
    %18 = arith.addf %16, %17 : vector<128x128xf32>
    %cst_15 = arith.constant 0.000000e+00 : f32
    %19 = vector.broadcast %cst_15 : f32 to vector<128x128xf32>
    %20 = arith.maximumf %18, %19 : vector<128x128xf32>
    %21 = arith.truncf %20 : vector<128x128xf32> to vector<128x128xbf16>
    %c0_16 = arith.constant 0 : index
    %c0_17 = arith.constant 0 : index
    %22 = vector.load %arg2[%c0_16, %c0_17] : memref<8x128xf32, #tpu.memory_space<vmem>>, vector<8x128xf32>
    %23 = arith.extf %21 : vector<128x128xbf16> to vector<128x128xf32>
    %cst_18 = arith.constant dense<0.000000e+00> : vector<8x128xf32>
    %24 = tpu.matmul %22, %23, %cst_18 {dimension_numbers = #tpu.dot_dimension_numbers<[1], [0], [0], [1], [0, 0, 1, 1], [], []>} : vector<8x128xf32>, vector<128x128xf32>, vector<8x128xf32> -> vector<8x128xf32>
    %c0_19 = arith.constant 0 : index
    %c0_20 = arith.constant 0 : index
    %25 = vector.load %arg7[%c0_19, %c0_20] : memref<128x128xf32, #tpu.memory_space<vmem>>, vector<128x128xf32>
    %cst_21 = arith.constant dense<0.000000e+00> : vector<8x128xf32>
    %26 = tpu.matmul %24, %25, %cst_21 {dimension_numbers = #tpu.dot_dimension_numbers<[1], [0], [0], [1], [0, 0, 1, 1], [], []>} : vector<8x128xf32>, vector<128x128xf32>, vector<8x128xf32> -> vector<8x128xf32>
    %c0_22 = arith.constant 0 : index
    %c0_23 = arith.constant 0 : index
    %27 = vector.load %arg8[%c0_22, %c0_23] : memref<1x128xf32, #tpu.memory_space<vmem>>, vector<1x128xf32>
    %28 = vector.broadcast %27 : vector<1x128xf32> to vector<8x128xf32>
    %29 = arith.addf %26, %28 : vector<8x128xf32>
    %c0_24 = arith.constant 0 : index
    %c0_25 = arith.constant 0 : index
    %30 = vector.load %arg9[%c0_24, %c0_25] : memref<8x128xf32, #tpu.memory_space<vmem>>, vector<8x128xf32>
    tpu.vector_store %arg9[%c0_24, %c0_25], %29 {strides = array<i32>} : memref<8x128xf32, #tpu.memory_space<vmem>>, vector<8x128xf32>,
    return
  }
}

</mosaic_0001>

<llo_original>
// kernel: tpu_custom_call.1
$region0: #{tpu_custom_call.1}
  #allocation0 [shape = 'u32[]', space=smem, size = 0x4, offset = 0x4, fixed_abs, tag = 'smem constant byte address 0x4 - core index']
  #allocation1 [shape = 'u32[72,128]{1,0:T(1,128)}', space=vmem, size = 0x9000, scoped, tag = 'internal scratch']
  %s0 = inlined_call_operand.hbm [shape: bf16[128,128], index: 0, kind: input, shape index: {}]
  %s1 = inlined_call_operand.hbm [shape: bf16[128,128], index: 1, kind: input, shape index: {}]
  %s2 = inlined_call_operand.hbm [shape: f32[8,128], index: 2, kind: input, shape index: {}]
  %s3 = inlined_call_operand.hbm [shape: bf16[128,128], index: 3, kind: input, shape index: {}]
  %s4 = inlined_call_operand.vmem [shape: f32[1,128], index: 4, kind: input, shape index: {}]
  %s5 = inlined_call_operand.hbm [shape: bf16[128,128], index: 5, kind: input, shape index: {}]
  %s6 = inlined_call_operand.vmem [shape: f32[1,128], index: 6, kind: input, shape index: {}]
  %s7 = inlined_call_operand.hbm [shape: f32[128,128], index: 7, kind: input, shape index: {}]
  %s8 = inlined_call_operand.vmem [shape: f32[1,128], index: 8, kind: input, shape index: {}]
  %s9 = inlined_call_operand.hbm [shape: f32[8,128], index: 9, kind: output, shape index: {}]
  %s10 = sld [smem:[#allocation0]]
  $region70: #{tpu_custom_call.1} parent=0
    _
  %s12 = ssub.s32 1, %s10
  %s13 = scalar_select 0, %s12, %s10
  $region1: #{tpu_custom_call.1} parent=0
    #allocation2 [shape = 'u8[32768]{0}', space=vmem, size = 0x8000, scoped, tag = 'input window, operand 0, single buffered']
    #allocation3 [shape = 's32[1]{0}', space=sflag, size = 0x4, scoped, tag = 'scoped memory for tpu_custom_call.1']
    #allocation4 [shape = 's32[1]{0}', space=sflag, size = 0x4, scoped, tag = 'scoped memory for tpu_custom_call.1']
    #allocation5 [shape = 'u8[32768]{0}', space=vmem, size = 0x8000, scoped, tag = 'input window, operand 1, single buffered']
    #allocation6 [shape = 's32[1]{0}', space=sflag, size = 0x4, scoped, tag = 'scoped memory for tpu_custom_call.1']
    #allocation7 [shape = 'u8[4096]{0}', space=vmem, size = 0x1000, scoped, tag = 'input window, operand 2, single buffered']
    #allocation8 [shape = 'u8[32768]{0}', space=vmem, size = 0x8000, scoped, tag = 'input window, operand 3, single buffered']
    #allocation9 [shape = 's32[1]{0}', space=sflag, size = 0x4, scoped, tag = 'scoped memory for tpu_custom_call.1']
    #allocation10 [shape = 'u8[32768]{0}', space=vmem, size = 0x8000, scoped, tag = 'input window, operand 5, single buffered']
    #allocation11 [shape = 'u8[65536]{0}', space=vmem, size = 0x10000, scoped, tag = 'input window, operand 7, single buffered']
    #allocation12 [shape = 's32[1]{0}', space=sflag, size = 0x4, scoped, tag = 'scoped memory for tpu_custom_call.1']
    #allocation13 [shape = 'u8[4096]{0}', space=vmem, size = 0x1000, scoped, tag = 'output window, operand 0, single buffered']
    %14 = vsyncpa [#allocation3], 0
    %15 = vsyncpa [#allocation6], 0
    %16 = vsyncpa [#allocation9], 0
    %17 = vsyncpa [#allocation12], 0
    %18 = vsyncpa [#allocation4], 0
    // Predicated region
    $region2: #{tpu_custom_call.1} parent=1 // pred_check
      _
    $region3: #{tpu_custom_call.1} parent=1 // pred_check_branch
      %20 = sbr.rel (0) target = $region5
    $region4: #{tpu_custom_call.1} parent=1 // pred_region
      %22 = vsyncadd [#allocation3], 0
      %s23 = sshll.u32 %s0, 4
      %s24 = int_to_ptr.hbm [resolvable:$true] %s23
      %s25 = sshll.u32 [#allocation2], 4
      %s26 = int_to_ptr.vmem [resolvable:$true] %s25
      %31 = dma.hbm_to_vmem [thread:$0]  %s24, 1024, %s26, [#allocation3], 64, 64, 4
    $region5: #{tpu_custom_call.1} parent=1 // pred_fallthru
      _
    // Predicated region
    $region6: #{tpu_custom_call.1} parent=1 // pred_check
      _
    $region7: #{tpu_custom_call.1} parent=1 // pred_check_branch
      %33 = sbr.rel (0) target = $region9
    $region8: #{tpu_custom_call.1} parent=1 // pred_region
      %35 = vsyncadd [#allocation6], 0
      %s36 = sshll.u32 %s1, 4
      %s37 = int_to_ptr.hbm [resolvable:$true] %s36
      %s38 = sshll.u32 [#allocation5], 4
      %s39 = int_to_ptr.vmem [resolvable:$true] %s38
      %44 = dma.hbm_to_vmem [thread:$0]  %s37, 1024, %s39, [#allocation6], 64, 64, 4
    $region9: #{tpu_custom_call.1} parent=1 // pred_fallthru
      _
    // Predicated region
    $region10: #{tpu_custom_call.1} parent=1 // pred_check
      _
    $region11: #{tpu_custom_call.1} parent=1 // pred_check_branch
      %46 = sbr.rel (0) target = $region13
    $region12: #{tpu_custom_call.1} parent=1 // pred_region
      %48 = vsyncadd [#allocation6], 0
      %s50 = sshll.u32 %s2, 4
      %s51 = int_to_ptr.hbm [resolvable:$true] %s50
      %s52 = sshll.u32 [#allocation7], 4
      %s53 = int_to_ptr.vmem [resolvable:$true] %s52
      %55 = dma.hbm_to_vmem [thread:$0]  %s51, 128, %s53, [#allocation6]
    $region13: #{tpu_custom_call.1} parent=1 // pred_fallthru
      _
    // Predicated region
    $region14: #{tpu_custom_call.1} parent=1 // pred_check
      _
    $region15: #{tpu_custom_call.1} parent=1 // pred_check_branch
      %57 = sbr.rel (0) target = $region17
    $region16: #{tpu_custom_call.1} parent=1 // pred_region
      %59 = vsyncadd [#allocation9], 0
      %s60 = sshll.u32 %s3, 4
      %s61 = int_to_ptr.hbm [resolvable:$true] %s60
      %s62 = sshll.u32 [#allocation8], 4
      %s63 = int_to_ptr.vmem [resolvable:$true] %s62
      %68 = dma.hbm_to_vmem [thread:$0]  %s61, 1024, %s63, [#allocation9], 64, 64, 4
    $region17: #{tpu_custom_call.1} parent=1 // pred_fallthru
      _
    // Predicated region
    $region18: #{tpu_custom_call.1} parent=1 // pred_check
      _
    $region19: #{tpu_custom_call.1} parent=1 // pred_check_branch
      %70 = sbr.rel (0) target = $region21
    $region20: #{tpu_custom_call.1} parent=1 // pred_region
      _
    $region21: #{tpu_custom_call.1} parent=1 // pred_fallthru
      _
    // Predicated region
    $region22: #{tpu_custom_call.1} parent=1 // pred_check
      _
    $region23: #{tpu_custom_call.1} parent=1 // pred_check_branch
      %72 = sbr.rel (0) target = $region25
    $region24: #{tpu_custom_call.1} parent=1 // pred_region
      %74 = vsyncadd [#allocation9], 0
      %s75 = sshll.u32 %s5, 4
      %s76 = int_to_ptr.hbm [resolvable:$true] %s75
      %s77 = sshll.u32 [#allocation10], 4
      %s78 = int_to_ptr.vmem [resolvable:$true] %s77
      %83 = dma.hbm_to_vmem [thread:$0]  %s76, 1024, %s78, [#allocation9], 64, 64, 4
    $region25: #{tpu_custom_call.1} parent=1 // pred_fallthru
      _
    // Predicated region
    $region26: #{tpu_custom_call.1} parent=1 // pred_check
      _
    $region27: #{tpu_custom_call.1} parent=1 // pred_check_branch
      %85 = sbr.rel (0) target = $region29
    $region28: #{tpu_custom_call.1} parent=1 // pred_region
      _
    $region29: #{tpu_custom_call.1} parent=1 // pred_fallthru
      _
    // Predicated region
    $region30: #{tpu_custom_call.1} parent=1 // pred_check
      _
    $region31: #{tpu_custom_call.1} parent=1 // pred_check_branch
      %87 = sbr.rel (0) target = $region33
    $region32: #{tpu_custom_call.1} parent=1 // pred_region
      %89 = vsyncadd [#allocation12], 0
      %s90 = sshll.u32 %s7, 4
      %s91 = int_to_ptr.hbm [resolvable:$true] %s90
      %s92 = sshll.u32 [#allocation11], 4
      %s93 = int_to_ptr.vmem [resolvable:$true] %s92
      %98 = dma.hbm_to_vmem [thread:$0]  %s91, 2048, %s93, [#allocation12], 128, 128, 8
    $region33: #{tpu_custom_call.1} parent=1 // pred_fallthru
      _
    // Predicated region
    $region34: #{tpu_custom_call.1} parent=1 // pred_check
      _
    $region35: #{tpu_custom_call.1} parent=1 // pred_check_branch
      %100 = sbr.rel (0) target = $region37
    $region36: #{tpu_custom_call.1} parent=1 // pred_region
      _
    $region37: #{tpu_custom_call.1} parent=1 // pred_fallthru
      _
    // Predicated region
    $region38: #{tpu_custom_call.1} parent=1 // pred_check
      _
    $region39: #{tpu_custom_call.1} parent=1 // pred_check_branch
      %102 = sbr.rel (0) target = $region41
    $region40: #{tpu_custom_call.1} parent=1 // pred_region
      %104 = dma.done [#allocation3], 1024
    $region41: #{tpu_custom_call.1} parent=1 // pred_fallthru
      _
    // Predicated region
    $region42: #{tpu_custom_call.1} parent=1 // pred_check
      _
    $region43: #{tpu_custom_call.1} parent=1 // pred_check_branch
      %106 = sbr.rel (0) target = $region45
    $region44: #{tpu_custom_call.1} parent=1 // pred_region
      %108 = dma.done [#allocation6], 1024
    $region45: #{tpu_custom_call.1} parent=1 // pred_fallthru
      _
    // Predicated region
    $region46: #{tpu_custom_call.1} parent=1 // pred_check
      _
    $region47: #{tpu_custom_call.1} parent=1 // pred_check_branch
      %110 = sbr.rel (0) target = $region49
    $region48: #{tpu_custom_call.1} parent=1 // pred_region
      %112 = dma.done [#allocation6], 128
    $region49: #{tpu_custom_call.1} parent=1 // pred_fallthru
      _
    // Predicated region
    $region50: #{tpu_custom_call.1} parent=1 // pred_check
      _
    $region51: #{tpu_custom_call.1} parent=1 // pred_check_branch
      %114 = sbr.rel (0) target = $region53
    $region52: #{tpu_custom_call.1} parent=1 // pred_region
      %116 = dma.done [#allocation9], 1024
    $region53: #{tpu_custom_call.1} parent=1 // pred_fallthru
      _
    // Predicated region
    $region54: #{tpu_custom_call.1} parent=1 // pred_check
      _
    $region55: #{tpu_custom_call.1} parent=1 // pred_check_branch
      %118 = sbr.rel (0) target = $region57
    $region56: #{tpu_custom_call.1} parent=1 // pred_region
      %120 = dma.done [#allocation9], 1024
    $region57: #{tpu_custom_call.1} parent=1 // pred_fallthru
      _
    // Predicated region
    $region58: #{tpu_custom_call.1} parent=1 // pred_check
      _
    $region59: #{tpu_custom_call.1} parent=1 // pred_check_branch
      %122 = sbr.rel (0) target = $region61
    $region60: #{tpu_custom_call.1} parent=1 // pred_region
      %124 = dma.done [#allocation12], 2048
    $region61: #{tpu_custom_call.1} parent=1 // pred_fallthru
      _
    %v125 = vld [vmem:[#allocation5] sm:$0xf]
    %v126 = vld [vmem:[#allocation5 + $0x4] sm:$0xf]
    %v127 = vld [vmem:[#allocation5 + $0x8] sm:$0xf]
    %v128 = vld [vmem:[#allocation5 + $0xc] sm:$0xf]
    %v129 = vld [vmem:[#allocation5 + $0x10] sm:$0xf]
    %v130 = vld [vmem:[#allocation5 + $0x14] sm:$0xf]
    %v131 = vld [vmem:[#allocation5 + $0x18] sm:$0xf]
    %v132 = vld [vmem:[#allocation5 + $0x1c] sm:$0xf]
    %v133 = vld [vmem:[#allocation5 + $0x20] sm:$0xf]
    %v134 = vld [vmem:[#allocation5 + $0x24] sm:$0xf]
    %v135 = vld [vmem:[#allocation5 + $0x28] sm:$0xf]
    %v136 = vld [vmem:[#allocation5 + $0x2c] sm:$0xf]
    %v137 = vld [vmem:[#allocation5 + $0x30] sm:$0xf]
    %v138 = vld [vmem:[#allocation5 + $0x34] sm:$0xf]
    %v139 = vld [vmem:[#allocation5 + $0x38] sm:$0xf]
    %v140 = vld [vmem:[#allocation5 + $0x3c] sm:$0xf]
    %v141 = vld [vmem:[#allocation2] sm:$0xf]
    %v142 = vld [vmem:[#allocation2 + $0x4] sm:$0xf]
    %v143 = vld [vmem:[#allocation2 + $0x8] sm:$0xf]
    %v144 = vld [vmem:[#allocation2 + $0xc] sm:$0xf]
    %v145 = vld [vmem:[#allocation2 + $0x10] sm:$0xf]
    %v146 = vld [vmem:[#allocation2 + $0x14] sm:$0xf]
    %v147 = vld [vmem:[#allocation2 + $0x18] sm:$0xf]
    %v148 = vld [vmem:[#allocation2 + $0x1c] sm:$0xf]
    %v149 = vld [vmem:[#allocation2 + $0x20] sm:$0xf]
    %v150 = vld [vmem:[#allocation2 + $0x24] sm:$0xf]
    %v151 = vld [vmem:[#allocation2 + $0x28] sm:$0xf]
    %v152 = vld [vmem:[#allocation2 + $0x2c] sm:$0xf]
    %v153 = vld [vmem:[#allocation2 + $0x30] sm:$0xf]
    %v154 = vld [vmem:[#allocation2 + $0x34] sm:$0xf]
    %v155 = vld [vmem:[#allocation2 + $0x38] sm:$0xf]
    %v156 = vld [vmem:[#allocation2 + $0x3c] sm:$0xf]
    %v157 = vld [vmem:[#allocation8] sm:$0xf]
    %v158 = vld [vmem:[#allocation8 + $0x4] sm:$0xf]
    %v159 = vld [vmem:[#allocation8 + $0x8] sm:$0xf]
    %v160 = vld [vmem:[#allocation8 + $0xc] sm:$0xf]
    %v161 = vld [vmem:[#allocation8 + $0x10] sm:$0xf]
    %v162 = vld [vmem:[#allocation8 + $0x14] sm:$0xf]
    %v163 = vld [vmem:[#allocation8 + $0x18] sm:$0xf]
    %v164 = vld [vmem:[#allocation8 + $0x1c] sm:$0xf]
    %v165 = vld [vmem:[#allocation8 + $0x20] sm:$0xf]
    %v166 = vld [vmem:[#allocation8 + $0x24] sm:$0xf]
    %v167 = vld [vmem:[#allocation8 + $0x28] sm:$0xf]
    %v168 = vld [vmem:[#allocation8 + $0x2c] sm:$0xf]
    %v169 = vld [vmem:[#allocation8 + $0x30] sm:$0xf]
    %v170 = vld [vmem:[#allocation8 + $0x34] sm:$0xf]
    %v171 = vld [vmem:[#allocation8 + $0x38] sm:$0xf]
    %v172 = vld [vmem:[#allocation8 + $0x3c] sm:$0xf]
    %v173 = vld [vmem:[%s4] sm:$0x1]
    %v190 = vunpack.c.l.b16 %v141
    %v191 = vunpack.c.l.b16 %v142
    %v192 = vunpack.c.l.b16 %v143
    %v193 = vunpack.c.l.b16 %v144
    %v194 = vunpack.c.l.b16 %v145
    %v195 = vunpack.c.l.b16 %v146
    %v196 = vunpack.c.l.b16 %v147
    %v197 = vunpack.c.l.b16 %v148
    %v198 = vunpack.c.l.b16 %v149
    %v199 = vunpack.c.l.b16 %v150
    %v200 = vunpack.c.l.b16 %v151
    %v201 = vunpack.c.l.b16 %v152
    %v202 = vunpack.c.l.b16 %v153
    %v203 = vunpack.c.l.b16 %v154
    %v204 = vunpack.c.l.b16 %v155
    %v205 = vunpack.c.l.b16 %v156
    %v206 = vpack.c.b16 %v191, %v190
    %v207 = vpack.c.b16 %v193, %v192
    %v208 = vpack.c.b16 %v195, %v194
    %v209 = vpack.c.b16 %v197, %v196
    %v210 = vpack.c.b16 %v199, %v198
    %v211 = vpack.c.b16 %v201, %v200
    %v212 = vpack.c.b16 %v203, %v202
    %v213 = vpack.c.b16 %v205, %v204
    %v238 = vunpack.c.l.b16 %v157
    %v239 = vunpack.c.l.b16 %v158
    %v240 = vunpack.c.l.b16 %v159
    %v241 = vunpack.c.l.b16 %v160
    %v242 = vunpack.c.l.b16 %v161
    %v243 = vunpack.c.l.b16 %v162
    %v244 = vunpack.c.l.b16 %v163
    %v245 = vunpack.c.l.b16 %v164
    %v246 = vunpack.c.l.b16 %v165
    %v247 = vunpack.c.l.b16 %v166
    %v248 = vunpack.c.l.b16 %v167
    %v249 = vunpack.c.l.b16 %v168
    %v250 = vunpack.c.l.b16 %v169
    %v251 = vunpack.c.l.b16 %v170
    %v252 = vunpack.c.l.b16 %v171
    %v253 = vunpack.c.l.b16 %v172
    %v254 = vpack.c.b16 %v239, %v238
    %v255 = vpack.c.b16 %v241, %v240
    %v256 = vpack.c.b16 %v243, %v242
    %v257 = vpack.c.b16 %v245, %v244
    %v258 = vpack.c.b16 %v247, %v246
    %v259 = vpack.c.b16 %v249, %v248
    %v260 = vpack.c.b16 %v251, %v250
    %v261 = vpack.c.b16 %v253, %v252
    %270 = vmatpush.bf16.msra.mxu0 %v261
    %271 = vmatpush.bf16.msra.mxu0 %v260
    %272 = vmatpush.bf16.msra.mxu0 %v259
    %273 = vmatpush.bf16.msra.mxu0 %v258
    %274 = vmatpush.bf16.msra.mxu0 %v257
    %275 = vmatpush.bf16.msra.mxu0 %v256
    %276 = vmatpush.bf16.msra.mxu0 %v255
    %277 = vmatpush.bf16.msra.mxu0 %v254
    %278 = vmatmul.bf16.gmra.mxu0 %v206
    %v279 = vpop.f32.mrf.mxu0
    %v280 = vadd.f32 0.0, %v279
    %v281 = vpop.f32.mrf.mxu0
    %v282 = vadd.f32 0.0, %v281
    %283 = vmatmul.bf16.gmra.mxu0 %v207
    %v284 = vpop.f32.mrf.mxu0
    %v285 = vadd.f32 0.0, %v284
    %v286 = vpop.f32.mrf.mxu0
    %v287 = vadd.f32 0.0, %v286
    %288 = vmatmul.bf16.gmra.mxu0 %v208
    %v289 = vpop.f32.mrf.mxu0
    %v290 = vadd.f32 0.0, %v289
    %v291 = vpop.f32.mrf.mxu0
    %v292 = vadd.f32 0.0, %v291
    %293 = vmatmul.bf16.gmra.mxu0 %v209
    %v294 = vpop.f32.mrf.mxu0
    %v295 = vadd.f32 0.0, %v294
    %v296 = vpop.f32.mrf.mxu0
    %v297 = vadd.f32 0.0, %v296
    %298 = vmatmul.bf16.gmra.mxu0 %v210
    %v299 = vpop.f32.mrf.mxu0
    %v300 = vadd.f32 0.0, %v299
    %v301 = vpop.f32.mrf.mxu0
    %v302 = vadd.f32 0.0, %v301
    %303 = vmatmul.bf16.gmra.mxu0 %v211
    %v304 = vpop.f32.mrf.mxu0
    %v305 = vadd.f32 0.0, %v304
    %v306 = vpop.f32.mrf.mxu0
    %v307 = vadd.f32 0.0, %v306
    %308 = vmatmul.bf16.gmra.mxu0 %v212
    %v309 = vpop.f32.mrf.mxu0
    %v310 = vadd.f32 0.0, %v309
    %v311 = vpop.f32.mrf.mxu0
    %v312 = vadd.f32 0.0, %v311
    %313 = vmatmul.bf16.gmra.mxu0 %v213
    %v314 = vpop.f32.mrf.mxu0
    %v315 = vadd.f32 0.0, %v314
    %v316 = vpop.f32.mrf.mxu0
    %v317 = vadd.f32 0.0, %v316
    %318 = vdwg.mxu0
    %v319 = vpack.c.bf16 %v282, %v280
    %v320 = vpack.c.bf16 %v287, %v285
    %v321 = vpack.c.bf16 %v292, %v290
    %v322 = vpack.c.bf16 %v297, %v295
    %v323 = vpack.c.bf16 %v302, %v300
    %v324 = vpack.c.bf16 %v307, %v305
    %v325 = vpack.c.bf16 %v312, %v310
    %v326 = vpack.c.bf16 %v317, %v315
    %v328 = vperm.slane %v173, 0
    %v346 = vunpack.c.l.b16 %v125
    %v347 = vunpack.c.l.b16 %v126
    %v348 = vunpack.c.l.b16 %v127
    %v349 = vunpack.c.l.b16 %v128
    %v350 = vunpack.c.l.b16 %v129
    %v351 = vunpack.c.l.b16 %v130
    %v352 = vunpack.c.l.b16 %v131
    %v353 = vunpack.c.l.b16 %v132
    %v354 = vunpack.c.l.b16 %v133
    %v355 = vunpack.c.l.b16 %v134
    %v356 = vunpack.c.l.b16 %v135
    %v357 = vunpack.c.l.b16 %v136
    %v358 = vunpack.c.l.b16 %v137
    %v359 = vunpack.c.l.b16 %v138
    %v360 = vunpack.c.l.b16 %v139
    %v361 = vunpack.c.l.b16 %v140
    %v362 = vpack.c.b16 %v347, %v346
    %v363 = vpack.c.b16 %v349, %v348
    %v364 = vpack.c.b16 %v351, %v350
    %v365 = vpack.c.b16 %v353, %v352
    %v366 = vpack.c.b16 %v355, %v354
    %v367 = vpack.c.b16 %v357, %v356
    %v368 = vpack.c.b16 %v359, %v358
    %v369 = vpack.c.b16 %v361, %v360
    %378 = vmatpush.bf16.msra.mxu0 %v326
    %379 = vmatpush.bf16.msra.mxu0 %v325
    %380 = vmatpush.bf16.msra.mxu0 %v324
    %381 = vmatpush.bf16.msra.mxu0 %v323
    %382 = vmatpush.bf16.msra.mxu0 %v322
    %383 = vmatpush.bf16.msra.mxu0 %v321
    %384 = vmatpush.bf16.msra.mxu0 %v320
    %385 = vmatpush.bf16.msra.mxu0 %v319
    %386 = vmatmul.bf16.gmra.mxu0 %v362
    %v387 = vpop.f32.mrf.mxu0
    %v388 = vadd.f32 %v328, %v387
    %v389 = vpop.f32.mrf.mxu0
    %v390 = vadd.f32 %v328, %v389
    %391 = vmatmul.bf16.gmra.mxu0 %v363
    %v392 = vpop.f32.mrf.mxu0
    %v393 = vadd.f32 %v328, %v392
    %v394 = vpop.f32.mrf.mxu0
    %v395 = vadd.f32 %v328, %v394
    %396 = vmatmul.bf16.gmra.mxu0 %v364
    %v397 = vpop.f32.mrf.mxu0
    %v398 = vadd.f32 %v328, %v397
    %v399 = vpop.f32.mrf.mxu0
    %v400 = vadd.f32 %v328, %v399
    %401 = vmatmul.bf16.gmra.mxu0 %v365
    %v402 = vpop.f32.mrf.mxu0
    %v403 = vadd.f32 %v328, %v402
    %v404 = vpop.f32.mrf.mxu0
    %v405 = vadd.f32 %v328, %v404
    %406 = vmatmul.bf16.gmra.mxu0 %v366
    %v407 = vpop.f32.mrf.mxu0
    %v408 = vadd.f32 %v328, %v407
    %v409 = vpop.f32.mrf.mxu0
    %v410 = vadd.f32 %v328, %v409
    %411 = vmatmul.bf16.gmra.mxu0 %v367
    %v412 = vpop.f32.mrf.mxu0
    %v413 = vadd.f32 %v328, %v412
    %v414 = vpop.f32.mrf.mxu0
    %v415 = vadd.f32 %v328, %v414
    %416 = vmatmul.bf16.gmra.mxu0 %v368
    %v417 = vpop.f32.mrf.mxu0
    %v418 = vadd.f32 %v328, %v417
    %v419 = vpop.f32.mrf.mxu0
    %v420 = vadd.f32 %v328, %v419
    %421 = vmatmul.bf16.gmra.mxu0 %v369
    %v422 = vpop.f32.mrf.mxu0
    %v423 = vadd.f32 %v328, %v422
    %v424 = vpop.f32.mrf.mxu0
    %v425 = vadd.f32 %v328, %v424
    %426 = vdwg.mxu0
    %v427 = vmax.f32 %v388, 0.0
    %v428 = vmax.f32 %v390, 0.0
    %v429 = vmax.f32 %v393, 0.0
    %v430 = vmax.f32 %v395, 0.0
    %v431 = vmax.f32 %v398, 0.0
    %v432 = vmax.f32 %v400, 0.0
    %v433 = vmax.f32 %v403, 0.0
    %v434 = vmax.f32 %v405, 0.0
    %v435 = vmax.f32 %v408, 0.0
    %v436 = vmax.f32 %v410, 0.0
    %v437 = vmax.f32 %v413, 0.0
    %v438 = vmax.f32 %v415, 0.0
    %v439 = vmax.f32 %v418, 0.0
    %v440 = vmax.f32 %v420, 0.0
    %v441 = vmax.f32 %v423, 0.0
    %v442 = vmax.f32 %v425, 0.0
    %v443 = vpack.c.bf16 %v428, %v427
    %v444 = vpack.c.bf16 %v430, %v429
    %v445 = vpack.c.bf16 %v432, %v431
    %v446 = vpack.c.bf16 %v434, %v433
    %v447 = vpack.c.bf16 %v436, %v435
    %v448 = vpack.c.bf16 %v438, %v437
    %v449 = vpack.c.bf16 %v440, %v439
    %v450 = vpack.c.bf16 %v442, %v441
    %v451 = vld [vmem:[#allocation10] sm:$0xf]
    %v452 = vld [vmem:[#allocation10 + $0x4] sm:$0xf]
    %v453 = vld [vmem:[#allocation10 + $0x8] sm:$0xf]
    %v454 = vld [vmem:[#allocation10 + $0xc] sm:$0xf]
    %v455 = vld [vmem:[#allocation10 + $0x10] sm:$0xf]
    %v456 = vld [vmem:[#allocation10 + $0x14] sm:$0xf]
    %v457 = vld [vmem:[#allocation10 + $0x18] sm:$0xf]
    %v458 = vld [vmem:[#allocation10 + $0x1c] sm:$0xf]
    %v459 = vld [vmem:[#allocation10 + $0x20] sm:$0xf]
    %v460 = vld [vmem:[#allocation10 + $0x24] sm:$0xf]
    %v461 = vld [vmem:[#allocation10 + $0x28] sm:$0xf]
    %v462 = vld [vmem:[#allocation10 + $0x2c] sm:$0xf]
    %v463 = vld [vmem:[#allocation10 + $0x30] sm:$0xf]
    %v464 = vld [vmem:[#allocation10 + $0x34] sm:$0xf]
    %v465 = vld [vmem:[#allocation10 + $0x38] sm:$0xf]
    %v466 = vld [vmem:[#allocation10 + $0x3c] sm:$0xf]
    %v467 = vld [vmem:[%s6] sm:$0x1]
    %v484 = vunpack.c.l.b16 %v451
    %v485 = vunpack.c.l.b16 %v452
    %v486 = vunpack.c.l.b16 %v453
    %v487 = vunpack.c.l.b16 %v454
    %v488 = vunpack.c.l.b16 %v455
    %v489 = vunpack.c.l.b16 %v456
    %v490 = vunpack.c.l.b16 %v457
    %v491 = vunpack.c.l.b16 %v458
    %v492 = vunpack.c.l.b16 %v459
    %v493 = vunpack.c.l.b16 %v460
    %v494 = vunpack.c.l.b16 %v461
    %v495 = vunpack.c.l.b16 %v462
    %v496 = vunpack.c.l.b16 %v463
    %v497 = vunpack.c.l.b16 %v464
    %v498 = vunpack.c.l.b16 %v465
    %v499 = vunpack.c.l.b16 %v466
    %v500 = vpack.c.b16 %v485, %v484
    %v501 = vpack.c.b16 %v487, %v486
    %v502 = vpack.c.b16 %v489, %v488
    %v503 = vpack.c.b16 %v491, %v490
    %v504 = vpack.c.b16 %v493, %v492
    %v505 = vpack.c.b16 %v495, %v494
    %v506 = vpack.c.b16 %v497, %v496
    %v507 = vpack.c.b16 %v499, %v498
    %516 = vmatpush.bf16.msra.mxu0 %v507
    %517 = vmatpush.bf16.msra.mxu0 %v506
    %518 = vmatpush.bf16.msra.mxu0 %v505
    %519 = vmatpush.bf16.msra.mxu0 %v504
    %520 = vmatpush.bf16.msra.mxu0 %v503
    %521 = vmatpush.bf16.msra.mxu0 %v502
    %522 = vmatpush.bf16.msra.mxu0 %v501
    %523 = vmatpush.bf16.msra.mxu0 %v500
    %524 = vmatmul.bf16.gmra.mxu0 %v443
    %v525 = vpop.f32.mrf.mxu0
    %v526 = vadd.f32 0.0, %v525
    %v527 = vpop.f32.mrf.mxu0
    %v528 = vadd.f32 0.0, %v527
    %529 = vmatmul.bf16.gmra.mxu0 %v444
    %v530 = vpop.f32.mrf.mxu0
    %v531 = vadd.f32 0.0, %v530
    %v532 = vpop.f32.mrf.mxu0
    %v533 = vadd.f32 0.0, %v532
    %534 = vmatmul.bf16.gmra.mxu0 %v445
    %v535 = vpop.f32.mrf.mxu0
    %v536 = vadd.f32 0.0, %v535
    %v537 = vpop.f32.mrf.mxu0
    %v538 = vadd.f32 0.0, %v537
    %539 = vmatmul.bf16.gmra.mxu0 %v446
    %v540 = vpop.f32.mrf.mxu0
    %v541 = vadd.f32 0.0, %v540
    %v542 = vpop.f32.mrf.mxu0
    %v543 = vadd.f32 0.0, %v542
    %544 = vmatmul.bf16.gmra.mxu0 %v447
    %v545 = vpop.f32.mrf.mxu0
    %v546 = vadd.f32 0.0, %v545
    %v547 = vpop.f32.mrf.mxu0
    %v548 = vadd.f32 0.0, %v547
    %549 = vmatmul.bf16.gmra.mxu0 %v448
    %v550 = vpop.f32.mrf.mxu0
    %v551 = vadd.f32 0.0, %v550
    %v552 = vpop.f32.mrf.mxu0
    %v553 = vadd.f32 0.0, %v552
    %554 = vmatmul.bf16.gmra.mxu0 %v449
    %v555 = vpop.f32.mrf.mxu0
    %v556 = vadd.f32 0.0, %v555
    %v557 = vpop.f32.mrf.mxu0
    %v558 = vadd.f32 0.0, %v557
    %559 = vmatmul.bf16.gmra.mxu0 %v450
    %v560 = vpop.f32.mrf.mxu0
    %v561 = vadd.f32 0.0, %v560
    %v562 = vpop.f32.mrf.mxu0
    %v563 = vadd.f32 0.0, %v562
    %564 = vdwg.mxu0
    %v565 = vpack.c.bf16 %v528, %v526
    %v566 = vpack.c.bf16 %v533, %v531
    %v567 = vpack.c.bf16 %v538, %v536
    %v568 = vpack.c.bf16 %v543, %v541
    %v569 = vpack.c.bf16 %v548, %v546
    %v570 = vpack.c.bf16 %v553, %v551
    %v571 = vpack.c.bf16 %v558, %v556
    %v572 = vpack.c.bf16 %v563, %v561
    %v574 = vperm.slane %v467, 0
    %576 = vmatpush.bf16.msra.mxu0 %v572
    %577 = vmatpush.bf16.msra.mxu0 %v571
    %578 = vmatpush.bf16.msra.mxu0 %v570
    %579 = vmatpush.bf16.msra.mxu0 %v569
    %580 = vmatpush.bf16.msra.mxu0 %v568
    %581 = vmatpush.bf16.msra.mxu0 %v567
    %582 = vmatpush.bf16.msra.mxu0 %v566
    %583 = vmatpush.bf16.msra.mxu0 %v565
    %584 = vmatmul.bf16.gmra.mxu0 %v362
    %v585 = vpop.f32.mrf.mxu0
    %v586 = vadd.f32 %v574, %v585
    %v587 = vpop.f32.mrf.mxu0
    %v588 = vadd.f32 %v574, %v587
    %589 = vmatmul.bf16.gmra.mxu0 %v363
    %v590 = vpop.f32.mrf.mxu0
    %v591 = vadd.f32 %v574, %v590
    %v592 = vpop.f32.mrf.mxu0
    %v593 = vadd.f32 %v574, %v592
    %594 = vmatmul.bf16.gmra.mxu0 %v364
    %v595 = vpop.f32.mrf.mxu0
    %v596 = vadd.f32 %v574, %v595
    %v597 = vpop.f32.mrf.mxu0
    %v598 = vadd.f32 %v574, %v597
    %599 = vmatmul.bf16.gmra.mxu0 %v365
    %v600 = vpop.f32.mrf.mxu0
    %v601 = vadd.f32 %v574, %v600
    %v602 = vpop.f32.mrf.mxu0
    %v603 = vadd.f32 %v574, %v602
    %604 = vmatmul.bf16.gmra.mxu0 %v366
    %v605 = vpop.f32.mrf.mxu0
    %v606 = vadd.f32 %v574, %v605
    %v607 = vpop.f32.mrf.mxu0
    %v608 = vadd.f32 %v574, %v607
    %609 = vmatmul.bf16.gmra.mxu0 %v367
    %v610 = vpop.f32.mrf.mxu0
    %v611 = vadd.f32 %v574, %v610
    %v612 = vpop.f32.mrf.mxu0
    %v613 = vadd.f32 %v574, %v612
    %614 = vmatmul.bf16.gmra.mxu0 %v368
    %v615 = vpop.f32.mrf.mxu0
    %v616 = vadd.f32 %v574, %v615
    %v617 = vpop.f32.mrf.mxu0
    %v618 = vadd.f32 %v574, %v617
    %619 = vmatmul.bf16.gmra.mxu0 %v369
    %v620 = vpop.f32.mrf.mxu0
    %v621 = vadd.f32 %v574, %v620
    %v622 = vpop.f32.mrf.mxu0
    %v623 = vadd.f32 %v574, %v622
    %624 = vdwg.mxu0
    %v625 = vmax.f32 %v586, 0.0
    %v626 = vmax.f32 %v588, 0.0
    %v627 = vmax.f32 %v591, 0.0
    %v628 = vmax.f32 %v593, 0.0
    %v629 = vmax.f32 %v596, 0.0
    %v630 = vmax.f32 %v598, 0.0
    %v631 = vmax.f32 %v601, 0.0
    %v632 = vmax.f32 %v603, 0.0
    %v633 = vmax.f32 %v606, 0.0
    %v634 = vmax.f32 %v608, 0.0
    %v635 = vmax.f32 %v611, 0.0
    %v636 = vmax.f32 %v613, 0.0
    %v637 = vmax.f32 %v616, 0.0
    %v638 = vmax.f32 %v618, 0.0
    %v639 = vmax.f32 %v621, 0.0
    %v640 = vmax.f32 %v623, 0.0
    %v641 = vpack.c.bf16 %v626, %v625
    %v642 = vpack.c.bf16 %v628, %v627
    %v643 = vpack.c.bf16 %v630, %v629
    %v644 = vpack.c.bf16 %v632, %v631
    %v645 = vpack.c.bf16 %v634, %v633
    %v646 = vpack.c.bf16 %v636, %v635
    %v647 = vpack.c.bf16 %v638, %v637
    %v648 = vpack.c.bf16 %v640, %v639
    %v649 = vld [vmem:[#allocation7] sm:$0xff]
    %v650 = vunpack.c.l.bf16 %v641
    %v651 = vunpack.c.h.bf16 %v641
    %v652 = vunpack.c.l.bf16 %v642
    %v653 = vunpack.c.h.bf16 %v642
    %v654 = vunpack.c.l.bf16 %v643
    %v655 = vunpack.c.h.bf16 %v643
    %v656 = vunpack.c.l.bf16 %v644
    %v657 = vunpack.c.h.bf16 %v644
    %v658 = vunpack.c.l.bf16 %v645
    %v659 = vunpack.c.h.bf16 %v645
    %v660 = vunpack.c.l.bf16 %v646
    %v661 = vunpack.c.h.bf16 %v646
    %v662 = vunpack.c.l.bf16 %v647
    %v663 = vunpack.c.h.bf16 %v647
    %v664 = vunpack.c.l.bf16 %v648
    %v665 = vunpack.c.h.bf16 %v648
    %666 = vmatpush.msra.mxu0 %v665
    %667 = vmatpush.msra.mxu0 %v664
    %668 = vmatpush.msra.mxu0 %v663
    %669 = vmatpush.msra.mxu0 %v662
    %670 = vmatpush.msra.mxu0 %v661
    %671 = vmatpush.msra.mxu0 %v660
    %672 = vmatpush.msra.mxu0 %v659
    %673 = vmatpush.msra.mxu0 %v658
    %674 = vmatpush.msra.mxu0 %v657
    %675 = vmatpush.msra.mxu0 %v656
    %676 = vmatpush.msra.mxu0 %v655
    %677 = vmatpush.msra.mxu0 %v654
    %678 = vmatpush.msra.mxu0 %v653
    %679 = vmatpush.msra.mxu0 %v652
    %680 = vmatpush.msra.mxu0 %v651
    %681 = vmatpush.msra.mxu0 %v650
    %682 = vmatmul.f32.gmra.mxu0 %v649
    %v683 = vpop.f32.mrf.mxu0
    %v684 = vadd.f32 0.0, %v683
    %685 = vdwg.mxu0
    %v686 = vld [vmem:[#allocation11] sm:$0xff]
    %v687 = vld [vmem:[#allocation11 + $0x8] sm:$0xff]
    %v688 = vld [vmem:[#allocation11 + $0x10] sm:$0xff]
    %v689 = vld [vmem:[#allocation11 + $0x18] sm:$0xff]
    %v690 = vld [vmem:[#allocation11 + $0x20] sm:$0xff]
    %v691 = vld [vmem:[#allocation11 + $0x28] sm:$0xff]
    %v692 = vld [vmem:[#allocation11 + $0x30] sm:$0xff]
    %v693 = vld [vmem:[#allocation11 + $0x38] sm:$0xff]
    %v694 = vld [vmem:[#allocation11 + $0x40] sm:$0xff]
    %v695 = vld [vmem:[#allocation11 + $0x48] sm:$0xff]
    %v696 = vld [vmem:[#allocation11 + $0x50] sm:$0xff]
    %v697 = vld [vmem:[#allocation11 + $0x58] sm:$0xff]
    %v698 = vld [vmem:[#allocation11 + $0x60] sm:$0xff]
    %v699 = vld [vmem:[#allocation11 + $0x68] sm:$0xff]
    %v700 = vld [vmem:[#allocation11 + $0x70] sm:$0xff]
    %v701 = vld [vmem:[#allocation11 + $0x78] sm:$0xff]
    %v702 = vld [vmem:[%s8] sm:$0x1]
    %v704 = vperm.slane %v702, 0
    %706 = vmatpush.msra.mxu0 %v701
    %707 = vmatpush.msra.mxu0 %v700
    %708 = vmatpush.msra.mxu0 %v699
    %709 = vmatpush.msra.mxu0 %v698
    %710 = vmatpush.msra.mxu0 %v697
    %711 = vmatpush.msra.mxu0 %v696
    %712 = vmatpush.msra.mxu0 %v695
    %713 = vmatpush.msra.mxu0 %v694
    %714 = vmatpush.msra.mxu0 %v693
    %715 = vmatpush.msra.mxu0 %v692
    %716 = vmatpush.msra.mxu0 %v691
    %717 = vmatpush.msra.mxu0 %v690
    %718 = vmatpush.msra.mxu0 %v689
    %719 = vmatpush.msra.mxu0 %v688
    %720 = vmatpush.msra.mxu0 %v687
    %721 = vmatpush.msra.mxu0 %v686
    %722 = vmatmul.f32.gmra.mxu0 %v684
    %v723 = vpop.f32.mrf.mxu0
    %v724 = vadd.f32 %v704, %v723
    %725 = vdwg.mxu0
    %726 = vst [vmem:[#allocation13] sm:$0xff] %v724
    // Predicated region
    $region62: #{tpu_custom_call.1} parent=1 // pred_check
      _
    $region63: #{tpu_custom_call.1} parent=1 // pred_check_branch
      %728 = sbr.rel (0) target = $region65
    $region64: #{tpu_custom_call.1} parent=1 // pred_region
      %730 = vsyncadd [#allocation4], 0
      %s732 = sshll.u32 [#allocation13], 4
      %s733 = int_to_ptr.vmem [resolvable:$true] %s732
      %s734 = sshll.u32 %s9, 4
      %s735 = int_to_ptr.hbm [resolvable:$true] %s734
      %737 = dma.vmem_to_hbm [thread:$0]  %s733, 128, %s735, [#allocation4]
    $region65: #{tpu_custom_call.1} parent=1 // pred_fallthru
      _
    // Predicated region
    $region66: #{tpu_custom_call.1} parent=1 // pred_check
      _
    $region67: #{tpu_custom_call.1} parent=1 // pred_check_branch
      %739 = sbr.rel (0) target = $region69
    $region68: #{tpu_custom_call.1} parent=1 // pred_region
      %741 = dma.done [#allocation4], 128
    $region69: #{tpu_custom_call.1} parent=1 // pred_fallthru
      _
    %742 = vsyncpa [#allocation3], 1
    %743 = vsyncpa [#allocation6], 1
    %744 = vsyncpa [#allocation9], 1
    %745 = vsyncpa [#allocation12], 1
    %746 = vsyncpa [#allocation4], 1

</llo_original>
